<compile_context>
chip_gen: v7x
topology: tpu7x:2x2x1
jax: 0.10.0
libtpu: 0.0.40
codegen_flags: <defaults>
</compile_context>

<pallas_src>
import functools
from typing import NamedTuple

import jax
import jax.numpy as jnp
from jax.experimental import pallas as pl
from jax.experimental.pallas import tpu as pltpu


def _round_up(x, m):
    return ((x + m - 1) // m) * m


def _vmem_capacity_bytes():
    """Generation-aware VMEM capacity (128 MiB on v5e/v6e, 64 MiB/TC on v7x)."""
    try:
        info = pltpu.get_tpu_info()
        cap = int(getattr(info, "vmem_capacity_bytes", 0) or 0)
        if cap > 0:
            return cap
    except Exception:
        pass
    return 64 << 20  # conservative fallback: v7x per-TensorCore VMEM


def _const_spec(shape):
    """Grid-invariant (resident) block; single-buffered when supported."""
    idx = lambda i: (0, 0)
    if hasattr(pl, "Buffered"):
        try:
            return pl.BlockSpec(shape, idx, pipeline_mode=pl.Buffered(1))
        except TypeError:
            pass  # older BlockSpec without pipeline_mode kwarg
    return pl.BlockSpec(shape, idx)


# ----------------------------------------------------------------------------
# Pallas kernel: fused MLP forward + (optional) feature capture
#   out_refs = (y_cat_ref,)            when features are not needed
#   out_refs = (y_cat_ref, feat_ref)   when they are (feat in bf16)
# ----------------------------------------------------------------------------
def _domain_aware_kernel(x_ref, w1_ref, b1_ref, wc_ref, bc_ref, *out_refs):
    # X streamed in unpadded f32; cast to bf16 in-VMEM (no wrapper pad/cast).
    x = x_ref[...].astype(jnp.bfloat16)                             # (tn, D)

    # hooked "layer_name" layer: ReLU(x @ W1 + b1), f32 MXU accumulation
    h = jnp.dot(x, w1_ref[...], preferred_element_type=jnp.float32)
    h = jnp.maximum(h + b1_ref[...], 0.0)                           # (tn, H) f32
    h_bf = h.astype(jnp.bfloat16)

    # fused output head [W2 | Wd]: one matmul, narrow (C+1)-lane store
    y = jnp.dot(h_bf, wc_ref[...],
                preferred_element_type=jnp.float32) + bc_ref[...]   # (tn, C+1)
    out_refs[0][...] = y

    if len(out_refs) > 1:                                           # static choice
        out_refs[1][...] = h_bf                                     # features, bf16


# ----------------------------------------------------------------------------
# One-time weight packing (hoisted out of the per-call jit path)
# ----------------------------------------------------------------------------
class PackedParams(NamedTuple):
    w1: jax.Array   # (D, H)   bf16
    b1: jax.Array   # (1, H)   f32
    wc: jax.Array   # (H, C+1) bf16   = [W2 | Wd]
    bc: jax.Array   # (1, C+1) f32    = [b2 | bd]


def pack_params(w1, b1, w2, b2, wd, bd):
    wc = jnp.concatenate([w2, wd], axis=1).astype(jnp.bfloat16)
    bc = jnp.concatenate([b2.reshape(1, -1), bd.reshape(1, -1)],
                         axis=1).astype(jnp.float32)
    return PackedParams(w1.astype(jnp.bfloat16),
                        b1.reshape(1, -1).astype(jnp.float32), wc, bc)


# ----------------------------------------------------------------------------
# Wrapper: batch-tiled pallas_call with generation-aware VMEM budgeting
# ----------------------------------------------------------------------------
def fused_domain_aware_mlp(x, packed, *, with_features=True, tile_n=2048):
    n, d = x.shape
    h_dim = packed.w1.shape[1]
    w_head = packed.wc.shape[1]                    # C + 1
    lane = 128

    vmem_cap = _vmem_capacity_bytes()

    # Per-row VMEM cost of streamed blocks (double-buffered) + temporaries.
    # VMEM blocks are lane-padded to 128 internally regardless of HBM width.
    d_l = _round_up(d, lane)
    h_l = _round_up(h_dim, lane)
    w_l = _round_up(w_head, lane)
    bytes_per_row = (2 * d_l * 4                   # X f32 stream
                     + 2 * w_l * 4                 # y f32 stream
                     + h_l * (4 + 2))              # h f32 + h bf16 temporaries
    if with_features:
        bytes_per_row += 2 * h_l * 2               # features bf16 stream
    resident = (d * h_l * 2 + 8 * h_l * 4          # W1, b1 (single-buffered)
                + h_dim * w_l * 2 + 8 * w_l * 4)   # [W2|Wd], [b2|bd]

    budget = max(int(0.6 * vmem_cap) - resident, 1 << 20)
    tn_cap = max(8, min(tile_n, (budget // bytes_per_row) // 8 * 8))

    # Balance the grid so the last tile over-pads by at most one sublane.
    n_blocks = max(1, -(-n // tn_cap))
    tn = max(8, min(tn_cap, _round_up(-(-n // n_blocks), 8)))
    grid = (pl.cdiv(n, tn),)

    out_shape = [jax.ShapeDtypeStruct((n, w_head), jnp.float32)]
    out_specs = [pl.BlockSpec((tn, w_head), lambda i: (i, 0))]
    if with_features:
        out_shape.append(jax.ShapeDtypeStruct((n, h_dim), jnp.bfloat16))
        out_specs.append(pl.BlockSpec((tn, h_dim), lambda i: (i, 0)))

    in_specs = [
        pl.BlockSpec((tn, d), lambda i: (i, 0)),   # X: streamed, unpadded
        _const_spec((d, h_dim)),                   # W1: resident
        _const_spec((1, h_dim)),                   # b1: resident
        _const_spec((h_dim, w_head)),              # [W2|Wd]: resident
        _const_spec((1, w_head)),                  # [b2|bd]: resident
    ]

    vmem_limit = tn * bytes_per_row + 2 * resident + (4 << 20)
    vmem_limit = max(16 << 20, min(int(0.9 * vmem_cap), int(vmem_limit)))

    feat_bytes = n * h_dim * 2 if with_features else 0
    cost = pl.CostEstimate(
        flops=2 * n * h_dim * (d + w_head),
        transcendentals=0,
        bytes_accessed=(n * d * x.dtype.itemsize
                        + packed.w1.size * 2 + packed.wc.size * 2
                        + packed.b1.size * 4 + packed.bc.size * 4
                        + n * w_head * 4 + feat_bytes),
    )

    outs = pl.pallas_call(
        _domain_aware_kernel,
        out_shape=tuple(out_shape),
        grid_spec=pltpu.PrefetchScalarGridSpec(
            num_scalar_prefetch=0,
            grid=grid,
            in_specs=in_specs,
            out_specs=tuple(out_specs)),
        compiler_params=pltpu.CompilerParams(
            dimension_semantics=("parallel",),
            vmem_limit_bytes=vmem_limit),
        cost_estimate=cost,
    )(x, packed.w1, packed.b1, packed.wc, packed.bc)

    if not isinstance(outs, (tuple, list)):
        outs = (outs,)
    y_cat = outs[0]
    feats = outs[1] if with_features else None

    c_dim = w_head - 1
    y_pred = y_cat[:, :c_dim]
    dom_logits = y_cat[:, c_dim]
    return y_pred, dom_logits, feats


# ----------------------------------------------------------------------------
# DomainAwareModule.forward semantics (glue in plain JAX)
# ----------------------------------------------------------------------------
def extract_source_indices(sample_domain):
    # skada convention: source domains have non-negative labels, target < 0.
    return sample_domain >= 0


@functools.partial(jax.jit, static_argnames=("is_fit", "return_features"))
def domain_aware_forward(packed, X, sample_domain=None,
                         is_fit=False, return_features=False):
    need_features = bool(is_fit or return_features)
    y_pred, dom_logits, features = fused_domain_aware_mlp(
        X, packed, with_features=need_features)

    if is_fit:
        # Torch splits into X_s / X_t and scatters back by source_idx; for a
        # stateless per-sample module the scatter reconstructs exactly the
        # full-batch result computed above, so the split is a value no-op.
        _ = extract_source_indices(sample_domain)
        return (y_pred, dom_logits, features, sample_domain)
    elif return_features:
        return (y_pred, features)
    else:
        return y_pred


# ----------------------------------------------------------------------------
# Deterministic parameter init + demo
# ----------------------------------------------------------------------------
def init_params(key, d, h, c):
    k1, k2, k3 = jax.random.split(key, 3)
    w1 = jax.random.normal(k1, (d, h), jnp.float32) * (1.0 / jnp.sqrt(d))
    b1 = jnp.zeros((1, h), jnp.float32)
    w2 = jax.random.normal(k2, (h, c), jnp.float32) * (1.0 / jnp.sqrt(h))
    b2 = jnp.zeros((1, c), jnp.float32)
    wd = jax.random.normal(k3, (h, 1), jnp.float32) * (1.0 / jnp.sqrt(h))
    bd = jnp.zeros((1, 1), jnp.float32)
    return (w1, b1, w2, b2, wd, bd)


if __name__ == "__main__":
    N, D, H, C = 8, 32, 32, 4

    key = jax.random.PRNGKey(0)
    kx, kp = jax.random.split(key)
    X = jax.random.normal(kx, (N, D), jnp.float32)
    # 4 source samples (domain label 1) and 4 target samples (domain label -1)
    sample_domain = jnp.array([1, 1, 1, 1, -1, -1, -1, -1], jnp.int32)
    w1, b1, w2, b2, wd, bd = init_params(kp, D, H, C)

    # one-time weight packing (hoisted out of the per-call jit path)
    packed = pack_params(w1, b1, w2, b2, wd, bd)
    packed = jax.block_until_ready(packed)

    # is_fit=True path: (y_pred, domain_pred, features, sample_domain)
    y_pred, domain_pred, features, sd_out = domain_aware_forward(
        packed, X, sample_domain, is_fit=True)
    jax.block_until_ready((y_pred, domain_pred, features))

    # inference path (no features output) and return_features path
    y_only = domain_aware_forward(packed, X)
    y_rf, feat_rf = domain_aware_forward(packed, X, return_features=True)
    jax.block_until_ready((y_only, y_rf, feat_rf))

    # correctness check against a plain-JAX reference using the same
    # bf16-input / f32-accumulate matmuls as the kernel
    h_ref = jnp.maximum(
        jnp.dot(X.astype(jnp.bfloat16), w1.astype(jnp.bfloat16),
                preferred_element_type=jnp.float32) + b1, 0.0)
    h_ref_bf = h_ref.astype(jnp.bfloat16)
    y_ref = jnp.dot(h_ref_bf, w2.astype(jnp.bfloat16),
                    preferred_element_type=jnp.float32) + b2
    d_ref = (jnp.dot(h_ref_bf, wd.astype(jnp.bfloat16),
                     preferred_element_type=jnp.float32) + bd)[:, 0]

    assert y_pred.shape == (N, C)
    assert features.shape == (N, H)
    assert domain_pred.shape == (N,)
    assert jnp.allclose(y_pred, y_ref, atol=1e-2, rtol=1e-2)
    assert jnp.allclose(features.astype(jnp.float32), h_ref, atol=5e-2, rtol=5e-2)
    assert jnp.allclose(domain_pred, d_ref, atol=1e-2, rtol=1e-2)
    # all three call paths must agree on y_pred / features
    assert jnp.allclose(y_only, y_pred, atol=1e-5)
    assert jnp.allclose(y_rf, y_pred, atol=1e-5)
    assert jnp.allclose(feat_rf.astype(jnp.float32),
                        features.astype(jnp.float32), atol=1e-5)

    print("KERNEL_OK")
</pallas_src>

<mosaic_0001>
module attributes {stable_mosaic.version = 11 : i64} {
  func.func @_domain_aware_kernel(%arg0: i32, %arg1: memref<8x32xf32, #tpu.memory_space<vmem>>, %arg2: memref<32x32xbf16, #tpu.memory_space<vmem>>, %arg3: memref<1x32xf32, #tpu.memory_space<vmem>>, %arg4: memref<32x5xbf16, #tpu.memory_space<vmem>>, %arg5: memref<1x5xf32, #tpu.memory_space<vmem>>, %arg6: memref<8x5xf32, #tpu.memory_space<vmem>>, %arg7: memref<8x32xbf16, #tpu.memory_space<vmem>>) attributes {dimension_semantics = [#tpu.dimension_semantics<parallel>], iteration_bounds = array<i64: 1>, scalar_prefetch = 0 : i64, scratch_operands = 0 : i64, tpu.core_type = #tpu.core_type<tc>, window_params = [{transform_indices = @transform_0, window_bounds = array<i64: 8, 32>}, {pipeline_mode = #tpu.pipeline_mode<synchronous>, transform_indices = @transform_1, window_bounds = array<i64: 32, 32>}, {pipeline_mode = #tpu.pipeline_mode<synchronous>, transform_indices = @transform_2, window_bounds = array<i64: 1, 32>}, {pipeline_mode = #tpu.pipeline_mode<synchronous>, transform_indices = @transform_3, window_bounds = array<i64: 32, 5>}, {pipeline_mode = #tpu.pipeline_mode<synchronous>, transform_indices = @transform_4, window_bounds = array<i64: 1, 5>}, {transform_indices = @transform_5, window_bounds = array<i64: 8, 5>}, {transform_indices = @transform_6, window_bounds = array<i64: 8, 32>}]} {
    %c0 = arith.constant 0 : index
    %c0_0 = arith.constant 0 : index
    %0 = vector.load %arg1[%c0, %c0_0] : memref<8x32xf32, #tpu.memory_space<vmem>>, vector<8x32xf32>
    %1 = arith.truncf %0 : vector<8x32xf32> to vector<8x32xbf16>
    %c0_1 = arith.constant 0 : index
    %c0_2 = arith.constant 0 : index
    %2 = vector.load %arg2[%c0_1, %c0_2] : memref<32x32xbf16, #tpu.memory_space<vmem>>, vector<32x32xbf16>
    %cst = arith.constant dense<0.000000e+00> : vector<8x32xf32>
    %3 = tpu.matmul %1, %2, %cst {dimension_numbers = #tpu.dot_dimension_numbers<[1], [0], [0], [1], [0, 0, 1, 1], [], []>} : vector<8x32xbf16>, vector<32x32xbf16>, vector<8x32xf32> -> vector<8x32xf32>
    %c0_3 = arith.constant 0 : index
    %c0_4 = arith.constant 0 : index
    %4 = vector.load %arg3[%c0_3, %c0_4] : memref<1x32xf32, #tpu.memory_space<vmem>>, vector<1x32xf32>
    %5 = vector.broadcast %4 : vector<1x32xf32> to vector<8x32xf32>
    %6 = arith.addf %3, %5 : vector<8x32xf32>
    %cst_5 = arith.constant 0.000000e+00 : f32
    %7 = vector.broadcast %cst_5 : f32 to vector<8x32xf32>
    %8 = arith.maximumf %6, %7 : vector<8x32xf32>
    %9 = arith.truncf %8 : vector<8x32xf32> to vector<8x32xbf16>
    %c0_6 = arith.constant 0 : index
    %c0_7 = arith.constant 0 : index
    %10 = vector.load %arg4[%c0_6, %c0_7] : memref<32x5xbf16, #tpu.memory_space<vmem>>, vector<32x5xbf16>
    %cst_8 = arith.constant dense<0.000000e+00> : vector<8x5xf32>
    %11 = tpu.matmul %9, %10, %cst_8 {dimension_numbers = #tpu.dot_dimension_numbers<[1], [0], [0], [1], [0, 0, 1, 1], [], []>} : vector<8x32xbf16>, vector<32x5xbf16>, vector<8x5xf32> -> vector<8x5xf32>
    %c0_9 = arith.constant 0 : index
    %c0_10 = arith.constant 0 : index
    %12 = vector.load %arg5[%c0_9, %c0_10] : memref<1x5xf32, #tpu.memory_space<vmem>>, vector<1x5xf32>
    %13 = vector.broadcast %12 : vector<1x5xf32> to vector<8x5xf32>
    %14 = arith.addf %11, %13 : vector<8x5xf32>
    %c0_11 = arith.constant 0 : index
    %c0_12 = arith.constant 0 : index
    %15 = vector.load %arg6[%c0_11, %c0_12] : memref<8x5xf32, #tpu.memory_space<vmem>>, vector<8x5xf32>
    tpu.vector_store %arg6[%c0_11, %c0_12], %14 {strides = array<i32>} : memref<8x5xf32, #tpu.memory_space<vmem>>, vector<8x5xf32>,
    %c0_13 = arith.constant 0 : index
    %c0_14 = arith.constant 0 : index
    %16 = vector.load %arg7[%c0_13, %c0_14] : memref<8x32xbf16, #tpu.memory_space<vmem>>, vector<8x32xbf16>
    tpu.vector_store %arg7[%c0_13, %c0_14], %9 {strides = array<i32>} : memref<8x32xbf16, #tpu.memory_space<vmem>>, vector<8x32xbf16>,
    return
  }
  func.func @transform_0(%arg0: i32) -> (i32, i32) {
    %c0_i32 = arith.constant 0 : i32
    %c0_i32_0 = arith.constant 0 : i32
    return %arg0, %c0_i32 : i32, i32
  }
  func.func @transform_1(%arg0: i32) -> (i32, i32) {
    %c0_i32 = arith.constant 0 : i32
    %c0_i32_0 = arith.constant 0 : i32
    %c0_i32_1 = arith.constant 0 : i32
    return %c0_i32, %c0_i32_0 : i32, i32
  }
  func.func @transform_2(%arg0: i32) -> (i32, i32) {
    %c0_i32 = arith.constant 0 : i32
    %c0_i32_0 = arith.constant 0 : i32
    %c0_i32_1 = arith.constant 0 : i32
    return %c0_i32, %c0_i32_0 : i32, i32
  }
  func.func @transform_3(%arg0: i32) -> (i32, i32) {
    %c0_i32 = arith.constant 0 : i32
    %c0_i32_0 = arith.constant 0 : i32
    %c0_i32_1 = arith.constant 0 : i32
    return %c0_i32, %c0_i32_0 : i32, i32
  }
  func.func @transform_4(%arg0: i32) -> (i32, i32) {
    %c0_i32 = arith.constant 0 : i32
    %c0_i32_0 = arith.constant 0 : i32
    %c0_i32_1 = arith.constant 0 : i32
    return %c0_i32, %c0_i32_0 : i32, i32
  }
  func.func @transform_5(%arg0: i32) -> (i32, i32) {
    %c0_i32 = arith.constant 0 : i32
    %c0_i32_0 = arith.constant 0 : i32
    return %arg0, %c0_i32 : i32, i32
  }
  func.func @transform_6(%arg0: i32) -> (i32, i32) {
    %c0_i32 = arith.constant 0 : i32
    %c0_i32_0 = arith.constant 0 : i32
    return %arg0, %c0_i32 : i32, i32
  }
}

</mosaic_0001>

<llo_original>
// kernel: domain_aware_forward.1
$region0: #{domain_aware_forward.1}
  #allocation0 [shape = 'u32[]', space=smem, size = 0x4, offset = 0x4, fixed_abs, tag = 'smem constant byte address 0x4 - core index']
  #allocation1 [shape = 'u32[144,128]{1,0:T(1,128)}', space=vmem, size = 0x12000, scoped, tag = 'internal scratch']
  %s0 = inlined_call_operand.vmem [shape: f32[8,32], index: 0, kind: input, shape index: {}]
  %s1 = inlined_call_operand.vmem [shape: bf16[32,32], index: 1, kind: input, shape index: {}]
  %s2 = inlined_call_operand.vmem [shape: f32[1,32], index: 2, kind: input, shape index: {}]
  %s3 = inlined_call_operand.vmem [shape: bf16[32,5], index: 3, kind: input, shape index: {}]
  %s4 = inlined_call_operand.vmem [shape: f32[1,5], index: 4, kind: input, shape index: {}]
  %s5 = inlined_call_operand.vmem [shape: f32[8,5], index: 5, kind: output, shape index: {0}]
  %s6 = inlined_call_operand.hbm [shape: bf16[8,32], index: 6, kind: output, shape index: {1}]
  %7 = xla_tuple %s5, %s6
  %s8 = sld [smem:[#allocation0]]
  $region38: #{domain_aware_forward.1} parent=0
    _
  %s10 = ssub.s32 1, %s8
  %s11 = scalar_select 0, %s10, %s8
  $region1: #{domain_aware_forward.1} parent=0
    #allocation2 [shape = 'u8[2048]{0}', space=vmem, size = 0x800, scoped, tag = 'output window, operand 1, single buffered']
    #allocation3 [shape = 's32[1]{0}', space=sflag, size = 0x4, scoped, tag = 'scoped memory for domain_aware_forward.1']
    %12 = vsyncpa [#allocation3], 0
    // Predicated region
    $region2: #{domain_aware_forward.1} parent=1 // pred_check
      _
    $region3: #{domain_aware_forward.1} parent=1 // pred_check_branch
      %14 = sbr.rel (0) target = $region5
    $region4: #{domain_aware_forward.1} parent=1 // pred_region
      _
    $region5: #{domain_aware_forward.1} parent=1 // pred_fallthru
      _
    // Predicated region
    $region6: #{domain_aware_forward.1} parent=1 // pred_check
      _
    $region7: #{domain_aware_forward.1} parent=1 // pred_check_branch
      %16 = sbr.rel (0) target = $region9
    $region8: #{domain_aware_forward.1} parent=1 // pred_region
      _
    $region9: #{domain_aware_forward.1} parent=1 // pred_fallthru
      _
    // Predicated region
    $region10: #{domain_aware_forward.1} parent=1 // pred_check
      _
    $region11: #{domain_aware_forward.1} parent=1 // pred_check_branch
      %18 = sbr.rel (0) target = $region13
    $region12: #{domain_aware_forward.1} parent=1 // pred_region
      _
    $region13: #{domain_aware_forward.1} parent=1 // pred_fallthru
      _
    // Predicated region
    $region14: #{domain_aware_forward.1} parent=1 // pred_check
      _
    $region15: #{domain_aware_forward.1} parent=1 // pred_check_branch
      %20 = sbr.rel (0) target = $region17
    $region16: #{domain_aware_forward.1} parent=1 // pred_region
      _
    $region17: #{domain_aware_forward.1} parent=1 // pred_fallthru
      _
    // Predicated region
    $region18: #{domain_aware_forward.1} parent=1 // pred_check
      _
    $region19: #{domain_aware_forward.1} parent=1 // pred_check_branch
      %22 = sbr.rel (0) target = $region21
    $region20: #{domain_aware_forward.1} parent=1 // pred_region
      _
    $region21: #{domain_aware_forward.1} parent=1 // pred_fallthru
      _
    %v24 = vld [vmem:[%s0] sm:$0xff]
    %v25 = vpack.c.bf16 %v24, %v24
    %v26 = vld [vmem:[%s1] sm:$0xf]
    %v27 = vld [vmem:[%s1 + $0x4] sm:$0xf]
    %v28 = vld [vmem:[%s1 + $0x8] sm:$0xf]
    %v29 = vld [vmem:[%s1 + $0xc] sm:$0xf]
    %v30 = vld [vmem:[%s2] sm:$0x1]
    %v32 = vlaneseq
    %v33 = vshrl.u32 %v32, 7
    %v34 = vsub.s32 0, %v33
    %v35 = vrot.slane %v30, %v34
    %v41 = vunpack.c.l.b16 %v26
    %v42 = vunpack.c.l.b16 %v27
    %v43 = vunpack.c.l.b16 %v28
    %v44 = vunpack.c.l.b16 %v29
    %v45 = vpack.c.b16 %v42, %v41
    %v46 = vpack.c.b16 %v44, %v43
    %vm49 = vcmask 261120
    %v51 = vsel %vm49, %v25, 0
    %53 = vmatprep.subr.bf16.mxu0 0
    %54 = vmatpush1.bf16.msra.mxu0 %v45
    %55 = vmatprep.subr.bf16.mxu0 0
    %56 = vmatpush1.bf16.msra.mxu0 %v46
    %57 = vmatprep.subr.bf16.mxu0 0
    %58 = vmatpush1.bf16.msra.mxu0 0
    %59 = vmatprep.subr.bf16.mxu0 0
    %60 = vmatpush1.bf16.msra.mxu0 0
    %61 = vmatprep.subr.bf16.mxu0 0
    %62 = vmatpush1.bf16.msra.mxu0 0
    %63 = vmatprep.subr.bf16.mxu0 0
    %64 = vmatpush1.bf16.msra.mxu0 0
    %65 = vmatprep.subr.bf16.mxu0 0
    %66 = vmatpush1.bf16.msra.mxu0 0
    %67 = vmatprep.subr.bf16.mxu0 0
    %68 = vmatpush1.bf16.msra.mxu0 0
    %69 = vmatprep.subr.bf16.mxu0 0
    %70 = vmatpush1.bf16.msra.mxu0 0
    %71 = vmatprep.subr.bf16.mxu0 0
    %72 = vmatpush1.bf16.msra.mxu0 0
    %73 = vmatprep.subr.bf16.mxu0 0
    %74 = vmatpush1.bf16.msra.mxu0 0
    %75 = vmatprep.subr.bf16.mxu0 0
    %76 = vmatpush1.bf16.msra.mxu0 0
    %77 = vmatprep.subr.bf16.mxu0 0
    %78 = vmatpush1.bf16.msra.mxu0 0
    %79 = vmatprep.subr.bf16.mxu0 0
    %80 = vmatpush1.bf16.msra.mxu0 0
    %81 = vmatprep.subr.bf16.mxu0 0
    %82 = vmatpush1.bf16.msra.mxu0 0
    %83 = vmatprep.subr.bf16.mxu0 0
    %84 = vmatpush1.bf16.msra.mxu0 0
    %85 = vmatprep.mubr.bf16.mxu0 0
    %86 = vmatmul.mubr.bf16.gmra.mrb[0].mxu0 %v51
    %v87 = vpop.f32.mrb[0].mxu0
    %v88 = vadd.f32 %v35, %v87
    %v89 = vpop.f32.mrb[0].mxu0
    %v90 = vpop.f32.mrb[0].mxu0
    %v91 = vpop.f32.mrb[0].mxu0
    %92 = vdwg.mxu0
    %v93 = vmax.f32 %v88, 0.0
    %v94 = vpack.c.bf16 %v93, %v93
    %v95 = vld [vmem:[%s3] sm:$0xf]
    %v96 = vld [vmem:[%s3 + $0x4] sm:$0xf]
    %v97 = vld [vmem:[%s3 + $0x8] sm:$0xf]
    %v98 = vld [vmem:[%s3 + $0xc] sm:$0xf]
    %v99 = vld [vmem:[%s4] sm:$0x1]
    %v101 = vlaneseq
    %v102 = vshrl.u32 %v101, 7
    %v103 = vsub.s32 0, %v102
    %v104 = vrot.slane %v99, %v103
    %v110 = vunpack.c.l.b16 %v95
    %v111 = vunpack.c.l.b16 %v96
    %v112 = vunpack.c.l.b16 %v97
    %v113 = vunpack.c.l.b16 %v98
    %v114 = vpack.c.b16 %v111, %v110
    %v115 = vpack.c.b16 %v113, %v112
    %v119 = vsel %vm49, %v94, 0
    %121 = vmatprep.subr.bf16.mxu0 0
    %122 = vmatpush1.bf16.msra.mxu0 %v114
    %123 = vmatprep.subr.bf16.mxu0 0
    %124 = vmatpush1.bf16.msra.mxu0 %v115
    %125 = vmatprep.subr.bf16.mxu0 0
    %126 = vmatpush1.bf16.msra.mxu0 0
    %127 = vmatprep.subr.bf16.mxu0 0
    %128 = vmatpush1.bf16.msra.mxu0 0
    %129 = vmatprep.subr.bf16.mxu0 0
    %130 = vmatpush1.bf16.msra.mxu0 0
    %131 = vmatprep.subr.bf16.mxu0 0
    %132 = vmatpush1.bf16.msra.mxu0 0
    %133 = vmatprep.subr.bf16.mxu0 0
    %134 = vmatpush1.bf16.msra.mxu0 0
    %135 = vmatprep.subr.bf16.mxu0 0
    %136 = vmatpush1.bf16.msra.mxu0 0
    %137 = vmatprep.subr.bf16.mxu0 0
    %138 = vmatpush1.bf16.msra.mxu0 0
    %139 = vmatprep.subr.bf16.mxu0 0
    %140 = vmatpush1.bf16.msra.mxu0 0
    %141 = vmatprep.subr.bf16.mxu0 0
    %142 = vmatpush1.bf16.msra.mxu0 0
    %143 = vmatprep.subr.bf16.mxu0 0
    %144 = vmatpush1.bf16.msra.mxu0 0
    %145 = vmatprep.subr.bf16.mxu0 0
    %146 = vmatpush1.bf16.msra.mxu0 0
    %147 = vmatprep.subr.bf16.mxu0 0
    %148 = vmatpush1.bf16.msra.mxu0 0
    %149 = vmatprep.subr.bf16.mxu0 0
    %150 = vmatpush1.bf16.msra.mxu0 0
    %151 = vmatprep.subr.bf16.mxu0 0
    %152 = vmatpush1.bf16.msra.mxu0 0
    %153 = vmatprep.mubr.bf16.mxu0 0
    %154 = vmatmul.mubr.bf16.gmra.mrb[0].mxu0 %v119
    %v155 = vpop.f32.mrb[0].mxu0
    %v156 = vadd.f32 %v104, %v155
    %v157 = vpop.f32.mrb[0].mxu0
    %v158 = vpop.f32.mrb[0].mxu0
    %v159 = vpop.f32.mrb[0].mxu0
    %160 = vdwg.mxu0
    %vm161 = vcmask 39936
    %162 = vst.msk [vmem:[%s5] sm:$0xff] %vm161, %v156
    %vm163 = vcmask 257024
    %164 = vst.msk [vmem:[#allocation2] sm:$0xf] %vm163, %v94
    // Predicated region
    $region22: #{domain_aware_forward.1} parent=1 // pred_check
      _
    $region23: #{domain_aware_forward.1} parent=1 // pred_check_branch
      %166 = sbr.rel (0) target = $region25
    $region24: #{domain_aware_forward.1} parent=1 // pred_region
      _
    $region25: #{domain_aware_forward.1} parent=1 // pred_fallthru
      _
    // Predicated region
    $region26: #{domain_aware_forward.1} parent=1 // pred_check
      _
    $region27: #{domain_aware_forward.1} parent=1 // pred_check_branch
      %168 = sbr.rel (0) target = $region29
    $region28: #{domain_aware_forward.1} parent=1 // pred_region
      %s170 = ssub.s32 64, 64
      %171 = vsyncadd [#allocation3], %s170
      %s173 = sshll.u32 [#allocation2], 4
      %s174 = int_to_ptr.vmem [resolvable:$true] %s173
      %176 = dma.vmem_to_hbm [thread:$0]  %s174, 64, %s6, [#allocation3]
    $region29: #{domain_aware_forward.1} parent=1 // pred_fallthru
      _
    // Predicated region
    $region30: #{domain_aware_forward.1} parent=1 // pred_check
      _
    $region31: #{domain_aware_forward.1} parent=1 // pred_check_branch
      %178 = sbr.rel (0) target = $region33
    $region32: #{domain_aware_forward.1} parent=1 // pred_region
      _
    $region33: #{domain_aware_forward.1} parent=1 // pred_fallthru
      _
    // Predicated region
    $region34: #{domain_aware_forward.1} parent=1 // pred_check
      _
    $region35: #{domain_aware_forward.1} parent=1 // pred_check_branch
      %180 = sbr.rel (0) target = $region37
    $region36: #{domain_aware_forward.1} parent=1 // pred_region
      %181 = dma.done [#allocation3], 64
    $region37: #{domain_aware_forward.1} parent=1 // pred_fallthru
      _
    %182 = vsyncpa [#allocation3], 1

</llo_original>
